<compile_context>
chip_gen: v7x
topology: tpu7x:2x2x1
jax: 0.10.0
libtpu: 0.0.40
codegen_flags: <defaults>
</compile_context>

<pallas_src>
import jax
import jax.numpy as jnp
from jax.experimental import pallas as pl
from jax.experimental.pallas import tpu as pltpu


def _make_rescale_kernel(factor):
    """Kernel with `factor` baked in as a compile-time constant."""

    def kernel(x_ref, o_ref):
        # Weak-typed python float keeps the array dtype for floating inputs.
        # TODO(synk): integer inputs truncate back to int here; PyTorch would
        # promote to float — edge case, out of scope for this module's use.
        o_ref[...] = (x_ref[...] * factor).astype(o_ref.dtype)

    return kernel


# Threshold under which we use one full-array block (fits VMEM on all gens).
_SMALL_BYTES = 4 * 1024 * 1024


def _tiling_params():
    """Per-generation (block_bytes, vmem_limit_bytes_or_None)."""
    try:
        kind = jax.devices()[0].device_kind.lower()
    except Exception:
        kind = ""
    if "v5e" in kind or "v5 lite" in kind or "v5lite" in kind:
        # v5e: 16 MiB scoped-VMEM default -> keep 2 MiB blocks
        # (8 MiB double-buffered in+out) to preserve double-buffering.
        return 2 << 20, None
    if "v6" in kind:
        # v6e: ~1.4 TB/s HBM; 4 MiB blocks cut per-step overhead to ~5%,
        # 16 MiB double-buffered traffic is well under the 32 MiB default.
        return 4 << 20, None
    if "7" in kind:
        # v7x: ~3.2 TB/s HBM, 64 MiB physical VMEM -> 8 MiB blocks; raise the
        # scoped limit to cover ~32 MiB of double-buffered in+out traffic.
        return 8 << 20, 40 << 20
    # Unknown / other generations: conservative middle ground.
    return 4 << 20, None


def _pick_width(total):
    """Widest lane-dense last dim that divides `total`, or None."""
    for w in (8192, 4096, 2048, 1024, 512, 256, 128):
        if total % w == 0:
            return w
    return None


def rescale(x: jax.Array, factor: float) -> jax.Array:
    """factor * x, computed in a Pallas TPU kernel."""
    orig_shape = x.shape
    dtype = x.dtype
    total = x.size
    itemsize = jnp.dtype(dtype).itemsize
    kernel = _make_rescale_kernel(factor)

    if total == 0:
        return x

    # ------------------------------------------------------------------
    # Small path: one full-array block, no grid.  Reshape sublane-dense
    # (total//128, 128) when possible so vregs are fully populated.
    # (Block == full array dims, so the (8,128) divisibility rule is waived.)
    # ------------------------------------------------------------------
    if total * itemsize <= _SMALL_BYTES:
        if total % 128 == 0 and total // 128 > 1:
            shape2d = (total // 128, 128)
        else:
            shape2d = (1, total)
        x2d = jnp.reshape(x, shape2d)
        out2d = pl.pallas_call(
            kernel,
            out_shape=jax.ShapeDtypeStruct(shape2d, dtype),
        )(x2d)
        return jnp.reshape(out2d, orig_shape)

    # ------------------------------------------------------------------
    # Large path: lane-dense slab [M, W], per-generation block size,
    # pl.cdiv grid with Pallas-masked ragged tail.
    # ------------------------------------------------------------------
    block_bytes, vmem_limit = _tiling_params()

    w = _pick_width(total)
    padded_total = total
    if w is None:
        # Ragged element count: pad the flat array up to a multiple of 512
        # so it still streams through the tiled path (no giant single block).
        w = 512
        padded_total = ((total + w - 1) // w) * w
    m = padded_total // w

    # Sublane packing: 8 rows for 32-bit, 16 for 16-bit, 32 for 8-bit dtypes.
    pack = max(8, 32 // max(1, itemsize))
    tm = max(pack, (block_bytes // itemsize) // w)
    tm = min(tm, m)
    tm = ((tm + pack - 1) // pack) * pack  # round up to sublane packing
    grid = (pl.cdiv(m, tm),)

    xf = jnp.reshape(x, (total,))
    if padded_total != total:
        xf = jnp.pad(xf, (0, padded_total - total))
    x2d = jnp.reshape(xf, (m, w))

    out2d = pl.pallas_call(
        kernel,
        out_shape=jax.ShapeDtypeStruct((m, w), dtype),
        grid=grid,
        in_specs=[pl.BlockSpec((tm, w), lambda i: (i, 0))],
        out_specs=pl.BlockSpec((tm, w), lambda i: (i, 0)),
        compiler_params=pltpu.CompilerParams(
            dimension_semantics=("parallel",),
            vmem_limit_bytes=vmem_limit,
        ),
    )(x2d)

    outf = jnp.reshape(out2d, (padded_total,))
    if padded_total != total:
        outf = outf[:total]
    return jnp.reshape(outf, orig_shape)


if __name__ == "__main__":
    key = jax.random.PRNGKey(0)
    factor = 0.5  # deterministic constructor arg

    # Small NCHW input consistent with a conv-style model: batch=2, C=4, 16x16.
    x_small = jax.random.normal(key, (2, 4, 16, 16), dtype=jnp.float32)
    y_small = jax.block_until_ready(rescale(x_small, factor))
    ref_small = factor * x_small
    assert y_small.shape == x_small.shape and y_small.dtype == x_small.dtype
    assert jnp.allclose(y_small, ref_small, atol=1e-6, rtol=1e-6)

    # Small bf16 input: dtype must be preserved.
    x_bf16 = jax.random.normal(key, (2, 4, 16, 16), dtype=jnp.bfloat16)
    y_bf16 = jax.block_until_ready(rescale(x_bf16, factor))
    assert y_bf16.dtype == jnp.bfloat16
    assert jnp.allclose(y_bf16.astype(jnp.float32),
                        factor * x_bf16.astype(jnp.float32),
                        atol=1e-2, rtol=1e-2)

    # Tiled (large) path.
    x_big = jax.random.normal(jax.random.PRNGKey(0), (8, 64, 128, 128),
                              dtype=jnp.float32)
    y_big = jax.block_until_ready(rescale(x_big, factor))
    ref_big = factor * x_big
    assert y_big.shape == x_big.shape and y_big.dtype == x_big.dtype
    assert jnp.allclose(y_big, ref_big, atol=1e-6, rtol=1e-6)

    # Large + ragged element count (not a multiple of 128): pad path.
    x_rag = jax.random.normal(jax.random.PRNGKey(0), (1048583,),
                              dtype=jnp.float32)
    y_rag = jax.block_until_ready(rescale(x_rag, factor))
    ref_rag = factor * x_rag
    assert y_rag.shape == x_rag.shape and y_rag.dtype == x_rag.dtype
    assert jnp.allclose(y_rag, ref_rag, atol=1e-6, rtol=1e-6)

    print("KERNEL_OK")
</pallas_src>

<mosaic_0001>
module attributes {stable_mosaic.version = 11 : i64} {
  func.func @kernel(%arg0: memref<16x128xf32, #tpu.memory_space<vmem>>, %arg1: memref<16x128xf32, #tpu.memory_space<vmem>>) attributes {dimension_semantics = [], scalar_prefetch = 0 : i64, scratch_operands = 0 : i64, tpu.core_type = #tpu.core_type<tc>} {
    %c0 = arith.constant 0 : index
    %c0_0 = arith.constant 0 : index
    %0 = vector.load %arg0[%c0, %c0_0] : memref<16x128xf32, #tpu.memory_space<vmem>>, vector<16x128xf32>
    %cst = arith.constant 5.000000e-01 : f32
    %1 = vector.broadcast %cst : f32 to vector<16x128xf32>
    %2 = arith.mulf %0, %1 : vector<16x128xf32>
    %c0_1 = arith.constant 0 : index
    %c0_2 = arith.constant 0 : index
    %3 = vector.load %arg1[%c0_1, %c0_2] : memref<16x128xf32, #tpu.memory_space<vmem>>, vector<16x128xf32>
    tpu.vector_store %arg1[%c0_1, %c0_2], %2 {strides = array<i32>} : memref<16x128xf32, #tpu.memory_space<vmem>>, vector<16x128xf32>,
    return
  }
}

</mosaic_0001>

<llo_original>
// kernel: tpu_custom_call.1
$region0: #{tpu_custom_call.1}
  #allocation0 [shape = 'u32[]', space=smem, size = 0x4, offset = 0x4, fixed_abs, tag = 'smem constant byte address 0x4 - core index']
  #allocation1 [shape = 'u32[144,128]{1,0:T(1,128)}', space=vmem, size = 0x12000, scoped, tag = 'internal scratch']
  %s0 = inlined_call_operand.hbm [shape: f32[16,128], index: 0, kind: input, shape index: {}]
  %s1 = inlined_call_operand.hbm [shape: f32[16,128], index: 1, kind: output, shape index: {}]
  %s2 = sld [smem:[#allocation0]]
  $region18: #{tpu_custom_call.1} parent=0
    _
  %s4 = ssub.s32 1, %s2
  %s5 = scalar_select 0, %s4, %s2
  $region1: #{tpu_custom_call.1} parent=0
    #allocation2 [shape = 'u8[8192]{0}', space=vmem, size = 0x2000, scoped, tag = 'input window, operand 0, single buffered']
    #allocation3 [shape = 's32[1]{0}', space=sflag, size = 0x4, scoped, tag = 'scoped memory for tpu_custom_call.1']
    #allocation4 [shape = 's32[1]{0}', space=sflag, size = 0x4, scoped, tag = 'scoped memory for tpu_custom_call.1']
    #allocation5 [shape = 'u8[8192]{0}', space=vmem, size = 0x2000, scoped, tag = 'output window, operand 0, single buffered']
    %6 = vsyncpa [#allocation3], 0
    %7 = vsyncpa [#allocation4], 0
    // Predicated region
    $region2: #{tpu_custom_call.1} parent=1 // pred_check
      _
    $region3: #{tpu_custom_call.1} parent=1 // pred_check_branch
      %9 = sbr.rel (0) target = $region5
    $region4: #{tpu_custom_call.1} parent=1 // pred_region
      %s11 = ssub.s32 256, 256
      %12 = vsyncadd [#allocation3], %s11
      %s13 = sshll.u32 [#allocation2], 4
      %s14 = int_to_ptr.vmem [resolvable:$true] %s13
      %19 = dma.hbm_to_vmem [thread:$0]  %s0, 256, %s14, [#allocation3], 128, 128, 8
    $region5: #{tpu_custom_call.1} parent=1 // pred_fallthru
      _
    // Predicated region
    $region6: #{tpu_custom_call.1} parent=1 // pred_check
      _
    $region7: #{tpu_custom_call.1} parent=1 // pred_check_branch
      %21 = sbr.rel (0) target = $region9
    $region8: #{tpu_custom_call.1} parent=1 // pred_region
      %22 = dma.done [#allocation3], 256
    $region9: #{tpu_custom_call.1} parent=1 // pred_fallthru
      _
    %v23 = vld [vmem:[#allocation2] sm:$0xff]
    %v24 = vld [vmem:[#allocation2 + $0x8] sm:$0xff]
    %v25 = vmul.f32 %v23, 0.5
    %v26 = vmul.f32 %v24, 0.5
    %27 = vst [vmem:[#allocation5] sm:$0xff] %v25
    %28 = vst [vmem:[#allocation5 + $0x8] sm:$0xff] %v26
    // Predicated region
    $region10: #{tpu_custom_call.1} parent=1 // pred_check
      _
    $region11: #{tpu_custom_call.1} parent=1 // pred_check_branch
      %30 = sbr.rel (0) target = $region13
    $region12: #{tpu_custom_call.1} parent=1 // pred_region
      %s32 = ssub.s32 256, 256
      %33 = vsyncadd [#allocation4], %s32
      %s34 = sshll.u32 [#allocation5], 4
      %s35 = int_to_ptr.vmem [resolvable:$true] %s34
      %40 = dma.vmem_to_hbm [thread:$0]  %s35, 256, %s1, [#allocation4], 128, 128, 8
    $region13: #{tpu_custom_call.1} parent=1 // pred_fallthru
      _
    // Predicated region
    $region14: #{tpu_custom_call.1} parent=1 // pred_check
      _
    $region15: #{tpu_custom_call.1} parent=1 // pred_check_branch
      %42 = sbr.rel (0) target = $region17
    $region16: #{tpu_custom_call.1} parent=1 // pred_region
      %43 = dma.done [#allocation4], 256
    $region17: #{tpu_custom_call.1} parent=1 // pred_fallthru
      _
    %44 = vsyncpa [#allocation3], 1
    %45 = vsyncpa [#allocation4], 1

</llo_original>
